<compile_context>
chip_gen: v5e
topology: v5e:2x2
jax: 0.10.0
libtpu: 0.0.40
codegen_flags: <defaults>
</compile_context>

<pallas_src>
import functools

import jax
import jax.numpy as jnp
import numpy as np
from jax import lax
from jax.experimental import pallas as pl
from jax.experimental.pallas import tpu as pltpu

VMEM_LIMIT = 48 * 1024 * 1024   # leave headroom below v7x's 64 MiB physical per-TC VMEM


def _round_up(x, m):
    return ((x + m - 1) // m) * m


# ----------------------------------------------------------------------------
# Kernel 1: spiro_projection MLP   y = relu(x @ W1 + b1) @ W2 + b2
#
# Per (i, k) grid step:   h_k = relu(x_i @ W1[:, k] + b1[:, k])   (f32 epilogue, v5e-safe)
#                         acc += h_k @ W2[k, :]                   (f32 VMEM accumulator)
# and at the last k:      out = (acc + b2).astype(out_dtype)
# ----------------------------------------------------------------------------
def proj_kernel(x_ref, w1_ref, b1_ref, w2_ref, b2_ref, out_ref, acc_ref):
    k = pl.program_id(1)

    @pl.when(k == 0)
    def _():
        acc_ref[...] = jnp.zeros_like(acc_ref)

    x = x_ref[...]                                                    # (TM, F) bf16
    h = jnp.dot(x, w1_ref[...], preferred_element_type=jnp.float32) + b1_ref[...]
    h = jnp.maximum(h, 0.0)
    # TODO(synk): nn.Dropout(0.1) is treated as eval-mode identity (no pltpu.prng_* masking).
    acc_ref[...] += jnp.dot(h.astype(w2_ref.dtype), w2_ref[...],
                            preferred_element_type=jnp.float32)

    @pl.when(k == pl.num_programs(1) - 1)
    def _():
        out_ref[...] = (acc_ref[...] + b2_ref[...]).astype(out_ref.dtype)


def spiro_projection(spiro_features, w1, b1, w2, b2, *, tm=256, out_dtype=jnp.float32):
    n, sp, f = spiro_features.shape
    h = w1.shape[1]
    m = n * sp
    tm = min(tm, _round_up(m, 8))            # small problems: one sublane-aligned tile
    mp = _round_up(m, tm)
    tk = 512 if h % 512 == 0 else h          # contraction tile over the hidden dim
    x = spiro_features.reshape(m, f).astype(w1.dtype)   # bf16 operands for the MXU
    if mp != m:
        x = jnp.pad(x, ((0, mp - m), (0, 0)))

    y = pl.pallas_call(
        proj_kernel,
        out_shape=jax.ShapeDtypeStruct((mp, h), out_dtype),
        grid_spec=pltpu.PrefetchScalarGridSpec(
            num_scalar_prefetch=0,
            grid=(mp // tm, h // tk),
            in_specs=[
                pl.BlockSpec((tm, f), lambda i, k: (i, 0)),   # row tile (constant over k)
                pl.BlockSpec((f, tk), lambda i, k: (0, k)),   # W1 column tile
                pl.BlockSpec((1, tk), lambda i, k: (0, k)),   # b1 tile
                pl.BlockSpec((tk, h), lambda i, k: (k, 0)),   # W2 row tile (never full (H,H))
                pl.BlockSpec((1, h), lambda i, k: (0, 0),     # b2: grid-constant ->
                             pipeline_mode=pl.Buffered(1)),   #   single-buffered
            ],
            out_specs=pl.BlockSpec((tm, h), lambda i, k: (i, 0)),
            scratch_shapes=[pltpu.VMEM((tm, h), jnp.float32)],
        ),
        compiler_params=pltpu.CompilerParams(
            dimension_semantics=("parallel", "arbitrary"),
            vmem_limit_bytes=VMEM_LIMIT,
        ),
    )(x, w1, b1, w2, b2)
    return y[:m].reshape(n, sp, h)


# ----------------------------------------------------------------------------
# Kernel 2: embedding DMA-gather + spiro-block insertion (one grid step per batch row)
# ----------------------------------------------------------------------------
def insert_kernel(ip_ref, si_ref, hs_ref, ids_ref,     # scalar prefetch (SMEM)
                  emb_hbm, spiro_ref,                  # inputs: HBM table, VMEM (Sp,H) block
                  out_ref,                             # output block (L, H) in VMEM
                  copy_sem,                            # scratch: DMA semaphores (nbuf,)
                  *, nbuf):
    b = pl.program_id(0)
    ip = ip_ref[b]                                     # special-token position, -1 if absent
    use_spiro = jnp.logical_and(hs_ref[b] != 0, ip >= 0)

    S = ids_ref.shape[1]
    Sp, _ = spiro_ref.shape
    L, H = out_ref.shape

    def row_copy(tok, dst, slot):
        # NOTE: every gather copy is exactly (1, H); the slot-drain waits below rely on
        # that fixed transfer size for semaphore accounting.
        return pltpu.make_async_copy(emb_hbm.at[pl.ds(tok, 1), :],
                                     out_ref.at[pl.ds(dst, 1), :],
                                     copy_sem.at[slot])

    # --- gather token embedding rows from HBM straight to their spliced positions -------
    def gather_step(s, carry):
        # SMEM reads / scalar address math BEFORE the semaphore wait: a .wait() breaks
        # SMEM sst->sld forwarding and would stall the scalar pipe every iteration.
        tok = ids_ref[b, s]
        shift = jnp.logical_and(use_spiro, s > ip)     # tokens after the special token shift
        dst = jnp.where(shift, s + (Sp - 1), s)        # token at s == ip is overwritten below
        slot = s % nbuf

        @pl.when(s >= nbuf)
        def _():   # retire the copy issued nbuf steps ago before reusing this slot
            row_copy(0, 0, slot).wait()

        row_copy(tok, dst, slot).start()
        return carry

    # unrolled so the LLO scheduler can overlap address math with DMA-descriptor issue
    lax.fori_loop(0, S, gather_step, 0, unroll=min(8, S))
    for k in range(nbuf):                              # drain: one outstanding copy per slot
        row_copy(0, 0, k).wait()

    # --- splice the projected spiro block at the special-token position -----------------
    # (the (Sp, H) block for this row was auto-pipelined into VMEM via scalar prefetch)
    @pl.when(use_spiro)
    def _():
        cp = pltpu.make_async_copy(spiro_ref,
                                   out_ref.at[pl.ds(ip, Sp), :],
                                   copy_sem.at[0])
        cp.start()
        cp.wait()

    # --- zero the right-padding tail for rows that keep their original length S ---------
    if L > S:
        @pl.when(jnp.logical_not(use_spiro))
        def _():
            out_ref[pl.ds(S, L - S), :] = jnp.zeros((L - S, H), out_ref.dtype)


def build_inputs_embeds(input_ids, emb_table, spiro_embeds,
                        insert_pos, spiro_idx, has_spiro, out_len, *, max_dma_inflight=32):
    B, S = input_ids.shape
    V, H = emb_table.shape
    Nsp, Sp, _ = spiro_embeds.shape
    L = out_len
    nbuf = min(max_dma_inflight, S)

    # scalar-prefetch-driven spiro BlockSpec: only this row's (Sp, H) block is resident,
    # selected by spiro_idx (clamped to 0 for rows without spiro features).
    def spiro_map(b, ip_ref, si_ref, hs_ref, ids_ref):
        return (jnp.maximum(si_ref[b], 0), 0, 0)

    grid_spec = pltpu.PrefetchScalarGridSpec(
        num_scalar_prefetch=4,                                       # ip, si, has, ids -> SMEM
        grid=(B,),
        in_specs=[
            pl.BlockSpec(memory_space=pl.ANY),                       # emb table stays in HBM
            pl.BlockSpec((None, Sp, H), spiro_map),                  # (Sp, H) block per row
        ],
        out_specs=pl.BlockSpec((None, L, H), lambda b, *_: (b, 0, 0)),
        scratch_shapes=[pltpu.SemaphoreType.DMA((nbuf,))],
    )
    # NOTE: inputs_embeds is emitted in emb_table.dtype (bf16 for a bf16 base LLM), so this
    # memory-bound kernel writes half the bytes vs an f32 staging buffer.  In production H
    # should be a multiple of 128 so row DMAs / tail stores are full-lane, unmasked.
    return pl.pallas_call(
        functools.partial(insert_kernel, nbuf=nbuf),
        out_shape=jax.ShapeDtypeStruct((B, L, H), emb_table.dtype),
        grid_spec=grid_spec,
        compiler_params=pltpu.CompilerParams(
            dimension_semantics=("parallel",),    # rows independent -> shard over v7x's 2 TCs
            vmem_limit_bytes=VMEM_LIMIT,
        ),
    )(insert_pos, spiro_idx, has_spiro, input_ids, emb_table, spiro_embeds)


# ----------------------------------------------------------------------------
# Full SpiroLLM forward (up to the base_model call)
# ----------------------------------------------------------------------------
def spirollm_forward(params, input_ids, attention_mask, labels,
                     spiro_features, has_spiro, special_token_id):
    B, S = input_ids.shape
    Nsp, Sp, F = spiro_features.shape
    L = max(S, S - 1 + Sp)

    # TODO(synk): the host-side short-circuit (spiro_features is None / no has_spiro ->
    # call base_model(input_ids=...) directly) is Python control flow and is not reproduced.

    # spiro_projection (Pallas kernel 1); output directly in embedding dtype
    spiro_embeds = spiro_projection(spiro_features,
                                    params["w1"], params["b1"],
                                    params["w2"], params["b2"],
                                    out_dtype=params["emb"].dtype)

    # scalar bookkeeping (glue)
    matches = (input_ids == special_token_id)
    any_match = jnp.any(matches, axis=1)
    insert_pos = jnp.where(any_match, jnp.argmax(matches, axis=1), -1).astype(jnp.int32)
    has_i = has_spiro.astype(jnp.int32)
    spiro_idx = (jnp.cumsum(has_i) - 1).astype(jnp.int32)

    # embedding gather + splice + pad (Pallas kernel 2)
    final_embeds = build_inputs_embeds(input_ids.astype(jnp.int32), params["emb"],
                                       spiro_embeds, insert_pos, spiro_idx, has_i, L)

    # attention-mask / labels splice (plain-JAX glue; integer bookkeeping only)
    use = jnp.logical_and(has_i != 0, insert_pos >= 0)
    j = jnp.arange(L)

    def splice_row(row, ip, u, fill_val, pad_val):
        shift = u & (j >= ip)
        src = jnp.where(shift, j - (Sp - 1), j)
        in_sp = u & (j >= ip) & (j < ip + Sp)
        valid = (~in_sp) & (src >= 0) & (src < S)
        g = row[jnp.clip(src, 0, S - 1)]
        return jnp.where(in_sp, fill_val, jnp.where(valid, g, pad_val)).astype(jnp.int32)

    final_mask = jax.vmap(lambda r, ip, u: splice_row(r, ip, u, 1, 0))(
        attention_mask, insert_pos, use)
    final_labels = jax.vmap(lambda r, ip, u: splice_row(r, ip, u, -100, -100))(
        labels, insert_pos, use)

    # TODO(synk): base_model(inputs_embeds=..., attention_mask=..., labels=...) is an
    # external pretrained LLM and is not re-implemented here.
    return final_embeds, final_mask, final_labels


# ----------------------------------------------------------------------------
# Reference (mirrors the PyTorch forward semantics; bf16 rounding mirrors the kernel)
# ----------------------------------------------------------------------------
def _bf16_round_np(a):
    return np.asarray(jnp.asarray(np.asarray(a, np.float32)).astype(jnp.bfloat16)
                      .astype(jnp.float32))


def reference_forward(params, input_ids, attention_mask, labels,
                      spiro_features, has_spiro, special_id, L):
    ids = np.asarray(input_ids)
    mask = np.asarray(attention_mask)
    lab = np.asarray(labels)
    feats = np.asarray(spiro_features, np.float32)
    emb = np.asarray(params["emb"], np.float32)
    w1 = np.asarray(jnp.asarray(params["w1"], jnp.float32))
    w2 = np.asarray(jnp.asarray(params["w2"], jnp.float32))
    b1 = np.asarray(params["b1"], np.float32)
    b2 = np.asarray(params["b2"], np.float32)
    B, S = ids.shape
    Nsp, Sp, F = feats.shape
    H = emb.shape[1]

    x = _bf16_round_np(feats.reshape(Nsp * Sp, F))
    h = np.maximum(x @ w1 + b1, 0.0)
    hb = _bf16_round_np(h)
    sp_emb = (hb @ w2 + b2).reshape(Nsp, Sp, H)

    has = np.asarray(has_spiro).astype(np.int64)
    sp_map = np.cumsum(has) - 1

    out_e = np.zeros((B, L, H), np.float32)
    out_m = np.zeros((B, L), np.int32)
    out_l = np.full((B, L), -100, np.int32)
    for i in range(B):
        e = emb[ids[i]]
        if has[i] and (ids[i] == special_id).any():
            p = int(np.argmax(ids[i] == special_id))
            ne = np.concatenate([e[:p], sp_emb[sp_map[i]], e[p + 1:]], 0)
            nm = np.concatenate([mask[i][:p], np.ones(Sp, np.int32), mask[i][p + 1:]], 0)
            nl = np.concatenate([lab[i][:p], np.full(Sp, -100, np.int32), lab[i][p + 1:]], 0)
        else:
            ne, nm, nl = e, mask[i], lab[i]
        out_e[i, :ne.shape[0]] = ne
        out_m[i, :nm.shape[0]] = nm
        out_l[i, :nl.shape[0]] = nl
    return out_e, out_m, out_l


# ----------------------------------------------------------------------------
if __name__ == "__main__":
    V, H, B, S, Sp, F = 32, 128, 2, 8, 4, 16     # vocab, hidden, batch, seq, spiro-seq, feat-dim
    special_id = V - 1

    keys = jax.random.split(jax.random.PRNGKey(0), 8)
    params = {
        "emb": jax.random.normal(keys[0], (V, H), jnp.float32) * 0.02,
        "w1": (jax.random.normal(keys[1], (F, H), jnp.float32) * 0.1).astype(jnp.bfloat16),
        "b1": jax.random.normal(keys[2], (1, H), jnp.float32) * 0.1,
        "w2": (jax.random.normal(keys[3], (H, H), jnp.float32) * 0.1).astype(jnp.bfloat16),
        "b2": jax.random.normal(keys[4], (1, H), jnp.float32) * 0.1,
    }

    input_ids = jax.random.randint(keys[5], (B, S), 0, V - 1).astype(jnp.int32)
    input_ids = input_ids.at[0, 3].set(special_id)          # sample 0 has the special token
    attention_mask = jnp.ones((B, S), jnp.int32)
    labels = jax.random.randint(keys[6], (B, S), 0, V - 1).astype(jnp.int32)
    spiro_features = jax.random.normal(keys[7], (1, Sp, F), jnp.float32)
    has_spiro = jnp.array([1, 0], jnp.int32)                 # sample 1 has no spiro features

    embeds, mask, labs = spirollm_forward(params, input_ids, attention_mask, labels,
                                          spiro_features, has_spiro, special_id)
    jax.block_until_ready((embeds, mask, labs))

    L = max(S, S - 1 + Sp)
    ref_e, ref_m, ref_l = reference_forward(params, input_ids, attention_mask, labels,
                                            spiro_features, has_spiro, special_id, L)
    np.testing.assert_allclose(np.asarray(embeds), ref_e, atol=2e-3, rtol=2e-3)
    np.testing.assert_array_equal(np.asarray(mask), ref_m)
    np.testing.assert_array_equal(np.asarray(labs), ref_l)

    print("KERNEL_OK")
</pallas_src>

<mosaic_0001>
module attributes {stable_mosaic.version = 11 : i64} {
  func.func @proj_kernel(%arg0: i32, %arg1: i32, %arg2: memref<8x16xbf16, #tpu.memory_space<vmem>>, %arg3: memref<16x128xbf16, #tpu.memory_space<vmem>>, %arg4: memref<1x128xf32, #tpu.memory_space<vmem>>, %arg5: memref<128x128xbf16, #tpu.memory_space<vmem>>, %arg6: memref<1x128xf32, #tpu.memory_space<vmem>>, %arg7: memref<8x128xf32, #tpu.memory_space<vmem>>, %arg8: memref<8x128xf32, #tpu.memory_space<vmem>>) attributes {dimension_semantics = [#tpu.dimension_semantics<parallel>, #tpu.dimension_semantics<arbitrary>], iteration_bounds = array<i64: 1, 1>, scalar_prefetch = 0 : i64, scratch_operands = 1 : i64, tpu.core_type = #tpu.core_type<tc>, window_params = [{transform_indices = @transform_0, window_bounds = array<i64: 8, 16>}, {transform_indices = @transform_1, window_bounds = array<i64: 16, 128>}, {transform_indices = @transform_2, window_bounds = array<i64: 1, 128>}, {transform_indices = @transform_3, window_bounds = array<i64: 128, 128>}, {pipeline_mode = #tpu.pipeline_mode<synchronous>, transform_indices = @transform_4, window_bounds = array<i64: 1, 128>}, {transform_indices = @transform_5, window_bounds = array<i64: 8, 128>}]} {
    %c0_i32 = arith.constant 0 : i32
    %0 = arith.cmpi eq, %arg1, %c0_i32 : i32
    %1 = arith.extui %0 : i1 to i32
    %c0_i32_0 = arith.constant 0 : i32
    %2 = arith.cmpi ne, %1, %c0_i32_0 : i32
    scf.if %2 {
      %cst_16 = arith.constant 0.000000e+00 : f32
      %20 = vector.broadcast %cst_16 : f32 to vector<8x128xf32>
      %c0_17 = arith.constant 0 : index
      %c0_18 = arith.constant 0 : index
      %21 = vector.load %arg8[%c0_17, %c0_18] : memref<8x128xf32, #tpu.memory_space<vmem>>, vector<8x128xf32>
      tpu.vector_store %arg8[%c0_17, %c0_18], %20 {strides = array<i32>} : memref<8x128xf32, #tpu.memory_space<vmem>>, vector<8x128xf32>,
    } else {
    }
    %c0 = arith.constant 0 : index
    %c0_1 = arith.constant 0 : index
    %3 = vector.load %arg2[%c0, %c0_1] : memref<8x16xbf16, #tpu.memory_space<vmem>>, vector<8x16xbf16>
    %c0_2 = arith.constant 0 : index
    %c0_3 = arith.constant 0 : index
    %4 = vector.load %arg3[%c0_2, %c0_3] : memref<16x128xbf16, #tpu.memory_space<vmem>>, vector<16x128xbf16>
    %cst = arith.constant dense<0.000000e+00> : vector<8x128xf32>
    %5 = tpu.matmul %3, %4, %cst {dimension_numbers = #tpu.dot_dimension_numbers<[1], [0], [0], [1], [0, 0, 1, 1], [], []>} : vector<8x16xbf16>, vector<16x128xbf16>, vector<8x128xf32> -> vector<8x128xf32>
    %c0_4 = arith.constant 0 : index
    %c0_5 = arith.constant 0 : index
    %6 = vector.load %arg4[%c0_4, %c0_5] : memref<1x128xf32, #tpu.memory_space<vmem>>, vector<1x128xf32>
    %7 = vector.broadcast %6 : vector<1x128xf32> to vector<8x128xf32>
    %8 = arith.addf %5, %7 : vector<8x128xf32>
    %cst_6 = arith.constant 0.000000e+00 : f32
    %9 = vector.broadcast %cst_6 : f32 to vector<8x128xf32>
    %10 = arith.maximumf %8, %9 : vector<8x128xf32>
    %c0_7 = arith.constant 0 : index
    %c0_8 = arith.constant 0 : index
    %11 = vector.load %arg8[%c0_7, %c0_8] : memref<8x128xf32, #tpu.memory_space<vmem>>, vector<8x128xf32>
    %12 = arith.truncf %10 : vector<8x128xf32> to vector<8x128xbf16>
    %c0_9 = arith.constant 0 : index
    %c0_10 = arith.constant 0 : index
    %13 = vector.load %arg5[%c0_9, %c0_10] : memref<128x128xbf16, #tpu.memory_space<vmem>>, vector<128x128xbf16>
    %cst_11 = arith.constant dense<0.000000e+00> : vector<8x128xf32>
    %14 = tpu.matmul %12, %13, %cst_11 {dimension_numbers = #tpu.dot_dimension_numbers<[1], [0], [0], [1], [0, 0, 1, 1], [], []>} : vector<8x128xbf16>, vector<128x128xbf16>, vector<8x128xf32> -> vector<8x128xf32>
    %15 = arith.addf %11, %14 : vector<8x128xf32>
    %c0_12 = arith.constant 0 : index
    %c0_13 = arith.constant 0 : index
    %16 = vector.load %arg8[%c0_12, %c0_13] : memref<8x128xf32, #tpu.memory_space<vmem>>, vector<8x128xf32>
    tpu.vector_store %arg8[%c0_12, %c0_13], %15 {strides = array<i32>} : memref<8x128xf32, #tpu.memory_space<vmem>>, vector<8x128xf32>,
    %c0_i32_14 = arith.constant 0 : i32
    %17 = arith.cmpi eq, %arg1, %c0_i32_14 : i32
    %18 = arith.extui %17 : i1 to i32
    %c0_i32_15 = arith.constant 0 : i32
    %19 = arith.cmpi ne, %18, %c0_i32_15 : i32
    scf.if %19 {
      %c0_16 = arith.constant 0 : index
      %c0_17 = arith.constant 0 : index
      %20 = vector.load %arg8[%c0_16, %c0_17] : memref<8x128xf32, #tpu.memory_space<vmem>>, vector<8x128xf32>
      %c0_18 = arith.constant 0 : index
      %c0_19 = arith.constant 0 : index
      %21 = vector.load %arg6[%c0_18, %c0_19] : memref<1x128xf32, #tpu.memory_space<vmem>>, vector<1x128xf32>
      %22 = vector.broadcast %21 : vector<1x128xf32> to vector<8x128xf32>
      %23 = arith.addf %20, %22 : vector<8x128xf32>
      %c0_20 = arith.constant 0 : index
      %c0_21 = arith.constant 0 : index
      %24 = vector.load %arg7[%c0_20, %c0_21] : memref<8x128xf32, #tpu.memory_space<vmem>>, vector<8x128xf32>
      tpu.vector_store %arg7[%c0_20, %c0_21], %23 {strides = array<i32>} : memref<8x128xf32, #tpu.memory_space<vmem>>, vector<8x128xf32>,
    } else {
    }
    return
  }
  func.func @transform_0(%arg0: i32, %arg1: i32) -> (i32, i32) {
    %c0_i32 = arith.constant 0 : i32
    %c0_i32_0 = arith.constant 0 : i32
    return %arg0, %c0_i32 : i32, i32
  }
  func.func @transform_1(%arg0: i32, %arg1: i32) -> (i32, i32) {
    %c0_i32 = arith.constant 0 : i32
    %c0_i32_0 = arith.constant 0 : i32
    return %c0_i32, %arg1 : i32, i32
  }
  func.func @transform_2(%arg0: i32, %arg1: i32) -> (i32, i32) {
    %c0_i32 = arith.constant 0 : i32
    %c0_i32_0 = arith.constant 0 : i32
    return %c0_i32, %arg1 : i32, i32
  }
  func.func @transform_3(%arg0: i32, %arg1: i32) -> (i32, i32) {
    %c0_i32 = arith.constant 0 : i32
    %c0_i32_0 = arith.constant 0 : i32
    return %arg1, %c0_i32 : i32, i32
  }
  func.func @transform_4(%arg0: i32, %arg1: i32) -> (i32, i32) {
    %c0_i32 = arith.constant 0 : i32
    %c0_i32_0 = arith.constant 0 : i32
    %c0_i32_1 = arith.constant 0 : i32
    return %c0_i32, %c0_i32_0 : i32, i32
  }
  func.func @transform_5(%arg0: i32, %arg1: i32) -> (i32, i32) {
    %c0_i32 = arith.constant 0 : i32
    %c0_i32_0 = arith.constant 0 : i32
    return %arg0, %c0_i32 : i32, i32
  }
}

</mosaic_0001>

<llo_original>
// kernel: tpu_custom_call.1
$region0: #{tpu_custom_call.1}
  #allocation0 [shape = 'u32[]', space=smem, size = 0x4, offset = 0x4, fixed_abs, tag = 'smem constant byte address 0x4 - core index']
  #allocation1 [shape = 'u32[72,128]{1,0:T(1,128)}', space=vmem, size = 0x9000, scoped, tag = 'internal scratch']
  #allocation2 [shape = 'f32[8,128]{1,0:T(8,128)}', space=vmem, size = 0x1000, scoped, tag = 'scratch operand']
  %s0 = inlined_call_operand.hbm [shape: bf16[8,16], index: 0, kind: input, shape index: {}]
  %s1 = inlined_call_operand.hbm [shape: bf16[16,128], index: 1, kind: input, shape index: {}]
  %s2 = inlined_call_operand.vmem [shape: f32[1,128], index: 2, kind: input, shape index: {}]
  %s3 = inlined_call_operand.hbm [shape: bf16[128,128], index: 3, kind: input, shape index: {}]
  %s4 = inlined_call_operand.vmem [shape: f32[1,128], index: 4, kind: input, shape index: {}]
  %s5 = inlined_call_operand.hbm [shape: f32[8,128], index: 5, kind: output, shape index: {}]
  %s6 = sld [smem:[#allocation0]]
  $region50: #{tpu_custom_call.1} parent=0
    _
  %s8 = ssub.s32 1, %s6
  %s9 = scalar_select 0, %s8, %s6
  $region1: #{tpu_custom_call.1} parent=0
    #allocation3 [shape = 'u8[2048]{0}', space=vmem, size = 0x800, scoped, tag = 'input window, operand 0, single buffered']
    #allocation4 [shape = 's32[1]{0}', space=sflag, size = 0x4, scoped, tag = 'scoped memory for tpu_custom_call.1']
    #allocation5 [shape = 's32[1]{0}', space=sflag, size = 0x4, scoped, tag = 'scoped memory for tpu_custom_call.1']
    #allocation6 [shape = 'u8[4096]{0}', space=vmem, size = 0x1000, scoped, tag = 'input window, operand 1, single buffered']
    #allocation7 [shape = 's32[1]{0}', space=sflag, size = 0x4, scoped, tag = 'scoped memory for tpu_custom_call.1']
    #allocation8 [shape = 'u8[32768]{0}', space=vmem, size = 0x8000, scoped, tag = 'input window, operand 3, single buffered']
    #allocation9 [shape = 'u8[4096]{0}', space=vmem, size = 0x1000, scoped, tag = 'output window, operand 0, single buffered']
    %10 = vsyncpa [#allocation4], 0
    %11 = vsyncpa [#allocation7], 0
    %12 = vsyncpa [#allocation5], 0
    // Predicated region
    $region2: #{tpu_custom_call.1} parent=1 // pred_check
      _
    $region3: #{tpu_custom_call.1} parent=1 // pred_check_branch
      %14 = sbr.rel (0) target = $region5
    $region4: #{tpu_custom_call.1} parent=1 // pred_region
      %16 = vsyncadd [#allocation4], 0
      %s18 = sshll.u32 %s0, 4
      %s19 = int_to_ptr.hbm [resolvable:$true] %s18
      %s20 = sshll.u32 [#allocation3], 4
      %s21 = int_to_ptr.vmem [resolvable:$true] %s20
      %23 = dma.hbm_to_vmem [thread:$0]  %s19, 64, %s21, [#allocation4]
    $region5: #{tpu_custom_call.1} parent=1 // pred_fallthru
      _
    // Predicated region
    $region6: #{tpu_custom_call.1} parent=1 // pred_check
      _
    $region7: #{tpu_custom_call.1} parent=1 // pred_check_branch
      %25 = sbr.rel (0) target = $region9
    $region8: #{tpu_custom_call.1} parent=1 // pred_region
      %27 = vsyncadd [#allocation7], 0
      %s28 = sshll.u32 %s1, 4
      %s29 = int_to_ptr.hbm [resolvable:$true] %s28
      %s30 = sshll.u32 [#allocation6], 4
      %s31 = int_to_ptr.vmem [resolvable:$true] %s30
      %36 = dma.hbm_to_vmem [thread:$0]  %s29, 128, %s31, [#allocation7], 64, 64, 4
    $region9: #{tpu_custom_call.1} parent=1 // pred_fallthru
      _
    // Predicated region
    $region10: #{tpu_custom_call.1} parent=1 // pred_check
      _
    $region11: #{tpu_custom_call.1} parent=1 // pred_check_branch
      %38 = sbr.rel (0) target = $region13
    $region12: #{tpu_custom_call.1} parent=1 // pred_region
      _
    $region13: #{tpu_custom_call.1} parent=1 // pred_fallthru
      _
    // Predicated region
    $region14: #{tpu_custom_call.1} parent=1 // pred_check
      _
    $region15: #{tpu_custom_call.1} parent=1 // pred_check_branch
      %40 = sbr.rel (0) target = $region17
    $region16: #{tpu_custom_call.1} parent=1 // pred_region
      %42 = vsyncadd [#allocation7], 0
      %s43 = sshll.u32 %s3, 4
      %s44 = int_to_ptr.hbm [resolvable:$true] %s43
      %s45 = sshll.u32 [#allocation8], 4
      %s46 = int_to_ptr.vmem [resolvable:$true] %s45
      %51 = dma.hbm_to_vmem [thread:$0]  %s44, 1024, %s46, [#allocation7], 64, 64, 4
    $region17: #{tpu_custom_call.1} parent=1 // pred_fallthru
      _
    // Predicated region
    $region18: #{tpu_custom_call.1} parent=1 // pred_check
      _
    $region19: #{tpu_custom_call.1} parent=1 // pred_check_branch
      %53 = sbr.rel (0) target = $region21
    $region20: #{tpu_custom_call.1} parent=1 // pred_region
      _
    $region21: #{tpu_custom_call.1} parent=1 // pred_fallthru
      _
    // Predicated region
    $region22: #{tpu_custom_call.1} parent=1 // pred_check
      _
    $region23: #{tpu_custom_call.1} parent=1 // pred_check_branch
      %55 = sbr.rel (0) target = $region25
    $region24: #{tpu_custom_call.1} parent=1 // pred_region
      %57 = dma.done [#allocation4], 64
    $region25: #{tpu_custom_call.1} parent=1 // pred_fallthru
      _
    // Predicated region
    $region26: #{tpu_custom_call.1} parent=1 // pred_check
      _
    $region27: #{tpu_custom_call.1} parent=1 // pred_check_branch
      %59 = sbr.rel (0) target = $region29
    $region28: #{tpu_custom_call.1} parent=1 // pred_region
      %61 = dma.done [#allocation7], 128
    $region29: #{tpu_custom_call.1} parent=1 // pred_fallthru
      _
    // Predicated region
    $region30: #{tpu_custom_call.1} parent=1 // pred_check
      _
    $region31: #{tpu_custom_call.1} parent=1 // pred_check_branch
      %63 = sbr.rel (0) target = $region33
    $region32: #{tpu_custom_call.1} parent=1 // pred_region
      %65 = dma.done [#allocation7], 1024
    $region33: #{tpu_custom_call.1} parent=1 // pred_fallthru
      _
    %p67 = scmp.eq.s32.totalorder 0, 0
    // Predicated region
    $region34: #{tpu_custom_call.1} parent=1 // pred_check
      %p68 = pneg %p67
    $region35: #{tpu_custom_call.1} parent=1 // pred_check_branch
      %70 = sbr.rel (%p68) target = $region37
    $region36: #{tpu_custom_call.1} parent=1 // pred_region
      %71 = vst [vmem:[#allocation2] sm:$0xff] 0.0
    $region37: #{tpu_custom_call.1} parent=1 // pred_fallthru
      _
    %v72 = vld [vmem:[#allocation3] sm:$0xf]
    %v73 = vld [vmem:[#allocation6] sm:$0xf]
    %v74 = vld [vmem:[#allocation6 + $0x4] sm:$0xf]
    %v75 = vld [vmem:[%s2] sm:$0x1]
    %v77 = vperm.slane %v75, 0
    %v81 = vunpack.c.l.b16 %v73
    %v82 = vunpack.c.l.b16 %v74
    %v83 = vpack.c.b16 %v82, %v81
    %vm85 = vcmask 130048
    %v87 = vsel %vm85, %v72, 0
    %89 = vmatpush.bf16.msra.mxu0 0
    %90 = vmatpush.bf16.msra.mxu0 0
    %91 = vmatpush.bf16.msra.mxu0 0
    %92 = vmatpush.bf16.msra.mxu0 0
    %93 = vmatpush.bf16.msra.mxu0 0
    %94 = vmatpush.bf16.msra.mxu0 0
    %95 = vmatpush.bf16.msra.mxu0 0
    %96 = vmatpush.bf16.msra.mxu0 %v83
    %97 = vmatmul.bf16.gmra.mxu0 %v87
    %v98 = vpop.f32.mrf.mxu0
    %v99 = vadd.f32 %v77, %v98
    %v100 = vpop.f32.mrf.mxu0
    %101 = vdwg.mxu0
    %v102 = vmax.f32 %v99, 0.0
    %v103 = vld [vmem:[#allocation2] sm:$0xff]
    %v104 = vpack.c.bf16 %v102, %v102
    %v105 = vld [vmem:[#allocation8] sm:$0xf]
    %v106 = vld [vmem:[#allocation8 + $0x4] sm:$0xf]
    %v107 = vld [vmem:[#allocation8 + $0x8] sm:$0xf]
    %v108 = vld [vmem:[#allocation8 + $0xc] sm:$0xf]
    %v109 = vld [vmem:[#allocation8 + $0x10] sm:$0xf]
    %v110 = vld [vmem:[#allocation8 + $0x14] sm:$0xf]
    %v111 = vld [vmem:[#allocation8 + $0x18] sm:$0xf]
    %v112 = vld [vmem:[#allocation8 + $0x1c] sm:$0xf]
    %v113 = vld [vmem:[#allocation8 + $0x20] sm:$0xf]
    %v114 = vld [vmem:[#allocation8 + $0x24] sm:$0xf]
    %v115 = vld [vmem:[#allocation8 + $0x28] sm:$0xf]
    %v116 = vld [vmem:[#allocation8 + $0x2c] sm:$0xf]
    %v117 = vld [vmem:[#allocation8 + $0x30] sm:$0xf]
    %v118 = vld [vmem:[#allocation8 + $0x34] sm:$0xf]
    %v119 = vld [vmem:[#allocation8 + $0x38] sm:$0xf]
    %v120 = vld [vmem:[#allocation8 + $0x3c] sm:$0xf]
    %v137 = vunpack.c.l.b16 %v105
    %v138 = vunpack.c.l.b16 %v106
    %v139 = vunpack.c.l.b16 %v107
    %v140 = vunpack.c.l.b16 %v108
    %v141 = vunpack.c.l.b16 %v109
    %v142 = vunpack.c.l.b16 %v110
    %v143 = vunpack.c.l.b16 %v111
    %v144 = vunpack.c.l.b16 %v112
    %v145 = vunpack.c.l.b16 %v113
    %v146 = vunpack.c.l.b16 %v114
    %v147 = vunpack.c.l.b16 %v115
    %v148 = vunpack.c.l.b16 %v116
    %v149 = vunpack.c.l.b16 %v117
    %v150 = vunpack.c.l.b16 %v118
    %v151 = vunpack.c.l.b16 %v119
    %v152 = vunpack.c.l.b16 %v120
    %v153 = vpack.c.b16 %v138, %v137
    %v154 = vpack.c.b16 %v140, %v139
    %v155 = vpack.c.b16 %v142, %v141
    %v156 = vpack.c.b16 %v144, %v143
    %v157 = vpack.c.b16 %v146, %v145
    %v158 = vpack.c.b16 %v148, %v147
    %v159 = vpack.c.b16 %v150, %v149
    %v160 = vpack.c.b16 %v152, %v151
    %169 = vmatpush.bf16.msra.mxu0 %v160
    %170 = vmatpush.bf16.msra.mxu0 %v159
    %171 = vmatpush.bf16.msra.mxu0 %v158
    %172 = vmatpush.bf16.msra.mxu0 %v157
    %173 = vmatpush.bf16.msra.mxu0 %v156
    %174 = vmatpush.bf16.msra.mxu0 %v155
    %175 = vmatpush.bf16.msra.mxu0 %v154
    %176 = vmatpush.bf16.msra.mxu0 %v153
    %177 = vmatmul.bf16.gmra.mxu0 %v104
    %v178 = vpop.f32.mrf.mxu0
    %v179 = vadd.f32 0.0, %v178
    %v180 = vpop.f32.mrf.mxu0
    %181 = vdwg.mxu0
    %v182 = vadd.f32 %v103, %v179
    %183 = vst [vmem:[#allocation2] sm:$0xff] %v182
    // Predicated region
    $region38: #{tpu_custom_call.1} parent=1 // pred_check
      %p184 = pneg %p67
    $region39: #{tpu_custom_call.1} parent=1 // pred_check_branch
      %186 = sbr.rel (%p184) target = $region41
    $region40: #{tpu_custom_call.1} parent=1 // pred_region
      %v187 = vld [vmem:[#allocation2] sm:$0xff]
      %v188 = vld [vmem:[%s4] sm:$0x1]
      %v190 = vperm.slane %v188, 0
      %v192 = vadd.f32 %v187, %v190
      %193 = vst [vmem:[#allocation9] sm:$0xff] %v192
    $region41: #{tpu_custom_call.1} parent=1 // pred_fallthru
      _
    // Predicated region
    $region42: #{tpu_custom_call.1} parent=1 // pred_check
      _
    $region43: #{tpu_custom_call.1} parent=1 // pred_check_branch
      %195 = sbr.rel (0) target = $region45
    $region44: #{tpu_custom_call.1} parent=1 // pred_region
      %197 = vsyncadd [#allocation5], 0
      %s199 = sshll.u32 [#allocation9], 4
      %s200 = int_to_ptr.vmem [resolvable:$true] %s199
      %s201 = sshll.u32 %s5, 4
      %s202 = int_to_ptr.hbm [resolvable:$true] %s201
      %204 = dma.vmem_to_hbm [thread:$0]  %s200, 128, %s202, [#allocation5]
    $region45: #{tpu_custom_call.1} parent=1 // pred_fallthru
      _
    // Predicated region
    $region46: #{tpu_custom_call.1} parent=1 // pred_check
      _
    $region47: #{tpu_custom_call.1} parent=1 // pred_check_branch
      %206 = sbr.rel (0) target = $region49
    $region48: #{tpu_custom_call.1} parent=1 // pred_region
      %208 = dma.done [#allocation5], 128
    $region49: #{tpu_custom_call.1} parent=1 // pred_fallthru
      _
    %209 = vsyncpa [#allocation4], 1
    %210 = vsyncpa [#allocation7], 1
    %211 = vsyncpa [#allocation5], 1

</llo_original>
